<compile_context>
chip_gen: v5e
topology: v5e:2x2
jax: 0.10.0
libtpu: 0.0.40
codegen_flags: <defaults>
</compile_context>

<pallas_src>
import jax
import jax.numpy as jnp
from jax.experimental import pallas as pl
from jax.experimental.pallas import tpu as pltpu

LANE = 128
SUBLANE = 8


def _round_up(x, m):
    return (x + m - 1) // m * m


# ---------------------------------------------------------------------------
# Kernel: one fused forward for a batch tile.
#   state_ref : [TB, D]            (matmul-operand dtype, f32 default)
#   w1_ref    : [D, H2_pad]        fused critic|actor layer-1 weights
#   b1_ref    : [1, H2_pad]        fused layer-1 bias (f32)
#   w2_ref    : [H2_pad, OUT_pad]  block-diagonal layer-2 weights
#   b2_ref    : [1, OUT_pad]       fused layer-2 bias (f32)
#   out_ref   : [TB, OUT_pad]      col 0 = value, cols 1:1+A = action mean
# ---------------------------------------------------------------------------
def actor_critic_kernel(state_ref, w1_ref, b1_ref, w2_ref, b2_ref, out_ref):
    x = state_ref[...]
    # Fused layer 1 (critic||actor) on the MXU, f32 accumulation.
    h = jnp.dot(x, w1_ref[...], preferred_element_type=jnp.float32) + b1_ref[...]
    # Elementwise stays f32 (v5e VPU has no bf16 elementwise).
    h = jnp.maximum(h, 0.0)
    # Fused block-diagonal layer 2 -> single small output matmul.
    # (astype is a no-op on the default f32 path.)
    o = jnp.dot(h.astype(w2_ref.dtype), w2_ref[...],
                preferred_element_type=jnp.float32) + b2_ref[...]
    out_ref[...] = o.astype(out_ref.dtype)


# ---------------------------------------------------------------------------
# Host-side, one-time param fusion + padding (NOT per forward call).
# Padded weight rows / bias columns are zero, so padding never leaks into the
# real output columns.
# ---------------------------------------------------------------------------
def prepare_fused_params(params, num_inputs, num_actions, hidden_size,
                         matmul_dtype=jnp.float32):
    D, H, A = num_inputs, hidden_size, num_actions
    H2 = 2 * H
    H2_pad = _round_up(H2, LANE)           # hidden stays lane-dense for the MXU
    OUT_pad = _round_up(1 + A, SUBLANE)    # small contiguous output slab

    # Layer 1: columns [0:H] = critic hidden, [H:2H] = actor hidden.
    w1 = jnp.zeros((D, H2_pad), jnp.float32)
    w1 = w1.at[:, 0:H].set(params["w1c"])
    w1 = w1.at[:, H:H2].set(params["w1a"])
    b1 = jnp.zeros((1, H2_pad), jnp.float32)
    b1 = b1.at[:, 0:H].set(params["b1c"])
    b1 = b1.at[:, H:H2].set(params["b1a"])

    # Layer 2 (block-diagonal): value <- critic hidden (col 0),
    #                           mean  <- actor hidden  (cols 1:1+A).
    w2 = jnp.zeros((H2_pad, OUT_pad), jnp.float32)
    w2 = w2.at[0:H, 0:1].set(params["w2c"])
    w2 = w2.at[H:H2, 1:1 + A].set(params["w2a"])
    b2 = jnp.zeros((1, OUT_pad), jnp.float32)
    b2 = b2.at[:, 0:1].set(params["b2c"])
    b2 = b2.at[:, 1:1 + A].set(params["b2a"])

    return {
        "w1": w1.astype(matmul_dtype),
        "b1": b1,                          # biases kept f32 (f32 elementwise path)
        "w2": w2.astype(matmul_dtype),
        "b2": b2,
        "dims": (D, H2_pad, A, OUT_pad),
        "matmul_dtype": matmul_dtype,
    }


# ---------------------------------------------------------------------------
# Forward wrapper.
# Returns (value [B,1], (mean [B,A], scale [A])) — the parameterization of
# Normal(actor(state), ones(num_actions)).
# ---------------------------------------------------------------------------
def actor_critic_forward(state, fused):
    B, D = state.shape
    D_chk, H2_pad, A, OUT_pad = fused["dims"]
    assert D == D_chk, "state feature dim does not match prepared params"
    mm_dtype = fused["matmul_dtype"]

    # Batch padded only to a sublane multiple (<= 7 wasted rows per call).
    B_pad = _round_up(B, SUBLANE)
    # Large batch tiles amortize per-grid-step overhead; cap keeps per-tile
    # VMEM (state + hidden + output, double-buffered) at a few MiB.
    TB = min(1024, B_pad)
    if B_pad // TB < 2 and B_pad >= 2 * SUBLANE:
        # Ensure >=2 grid steps so v7x's two TensorCores both get work.
        TB = _round_up(pl.cdiv(B_pad, 2), SUBLANE)
    grid = (pl.cdiv(B_pad, TB),)

    x = state if state.dtype == mm_dtype else state.astype(mm_dtype)
    if B_pad != B:
        x = jnp.zeros((B_pad, D), mm_dtype).at[:B, :].set(x)

    itemsize = jnp.dtype(mm_dtype).itemsize
    cost = pl.CostEstimate(
        flops=2 * B_pad * (D * H2_pad + H2_pad * OUT_pad),
        transcendentals=0,
        bytes_accessed=(B_pad * D + fused["w1"].size + fused["w2"].size) * itemsize
        + (fused["b1"].size + fused["b2"].size + B_pad * OUT_pad) * 4,
    )

    out = pl.pallas_call(
        actor_critic_kernel,
        out_shape=jax.ShapeDtypeStruct((B_pad, OUT_pad), jnp.float32),
        grid=grid,
        in_specs=[
            # Batch-tiled state: pipelined per grid step; last dim == full D.
            pl.BlockSpec((TB, D), lambda i: (i, 0)),
            # Weights/biases: same block every step -> kept VMEM-resident.
            pl.BlockSpec((D, H2_pad), lambda i: (0, 0)),
            pl.BlockSpec((1, H2_pad), lambda i: (0, 0)),
            pl.BlockSpec((H2_pad, OUT_pad), lambda i: (0, 0)),
            pl.BlockSpec((1, OUT_pad), lambda i: (0, 0)),
        ],
        out_specs=pl.BlockSpec((TB, OUT_pad), lambda i: (i, 0)),
        compiler_params=pltpu.CompilerParams(
            dimension_semantics=("parallel",),
            vmem_limit_bytes=32 * 1024 * 1024),
        cost_estimate=cost,
    )(x, fused["w1"], fused["b1"], fused["w2"], fused["b2"])

    value = out[:B, 0:1]
    mean = out[:B, 1:1 + A]
    scale = jnp.ones((A,), dtype=jnp.float32)
    return value, (mean, scale)


# ---------------------------------------------------------------------------
# Init matching nn.Linear's U(-1/sqrt(fan_in), 1/sqrt(fan_in)).
# ---------------------------------------------------------------------------
def init_params(key, num_inputs, num_actions, hidden_size):
    ks = jax.random.split(key, 8)

    def linear(kw, kb, fan_in, fan_out):
        bound = 1.0 / jnp.sqrt(jnp.float32(fan_in))
        w = jax.random.uniform(kw, (fan_in, fan_out), jnp.float32, -bound, bound)
        b = jax.random.uniform(kb, (1, fan_out), jnp.float32, -bound, bound)
        return w, b

    w1c, b1c = linear(ks[0], ks[1], num_inputs, hidden_size)
    w2c, b2c = linear(ks[2], ks[3], hidden_size, 1)
    w1a, b1a = linear(ks[4], ks[5], num_inputs, hidden_size)
    w2a, b2a = linear(ks[6], ks[7], hidden_size, num_actions)
    return {
        "w1c": w1c, "b1c": b1c, "w2c": w2c, "b2c": b2c,
        "w1a": w1a, "b1a": b1a, "w2a": w2a, "b2a": b2a,
    }


def reference_forward(state, params):
    """Pure-JAX (f32) reference for correctness checking."""
    hc = jnp.maximum(state @ params["w1c"] + params["b1c"], 0.0)
    v = hc @ params["w2c"] + params["b2c"]
    ha = jnp.maximum(state @ params["w1a"] + params["b1a"], 0.0)
    mu = ha @ params["w2a"] + params["b2a"]
    return v, mu


if __name__ == "__main__":
    num_inputs, num_actions, hidden_size = 16, 4, 32

    key = jax.random.PRNGKey(0)
    k_params, k_state1, k_state2 = jax.random.split(key, 3)
    params = init_params(k_params, num_inputs, num_actions, hidden_size)
    fused = prepare_fused_params(params, num_inputs, num_actions, hidden_size)

    # --- small batch (single tile) ---
    batch = 8
    state = jax.random.normal(k_state1, (batch, num_inputs), jnp.float32)
    v_ref, mu_ref = reference_forward(state, params)

    value, (mean, scale) = actor_critic_forward(state, fused)
    jax.block_until_ready((value, mean))

    assert value.shape == (batch, 1)
    assert mean.shape == (batch, num_actions)
    assert scale.shape == (num_actions,)
    assert jnp.allclose(value, v_ref, atol=1e-5, rtol=1e-5)
    assert jnp.allclose(mean, mu_ref, atol=1e-5, rtol=1e-5)

    # --- larger, non-multiple-of-8 batch: exercises batch-only padding,
    #     multi-step grid (>=2 steps -> both v7x TensorCores) ---
    batch2 = 300
    state2 = jax.random.normal(k_state2, (batch2, num_inputs), jnp.float32)
    v_ref2, mu_ref2 = reference_forward(state2, params)

    value2, (mean2, _) = actor_critic_forward(state2, fused)
    jax.block_until_ready((value2, mean2))

    assert value2.shape == (batch2, 1)
    assert mean2.shape == (batch2, num_actions)
    assert jnp.allclose(value2, v_ref2, atol=1e-5, rtol=1e-5)
    assert jnp.allclose(mean2, mu_ref2, atol=1e-5, rtol=1e-5)

    print("KERNEL_OK")
</pallas_src>

<mosaic_0001>
module attributes {stable_mosaic.version = 11 : i64} {
  func.func @actor_critic_kernel(%arg0: i32, %arg1: memref<8x16xf32, #tpu.memory_space<vmem>>, %arg2: memref<16x128xf32, #tpu.memory_space<vmem>>, %arg3: memref<1x128xf32, #tpu.memory_space<vmem>>, %arg4: memref<128x8xf32, #tpu.memory_space<vmem>>, %arg5: memref<1x8xf32, #tpu.memory_space<vmem>>, %arg6: memref<8x8xf32, #tpu.memory_space<vmem>>) attributes {dimension_semantics = [#tpu.dimension_semantics<parallel>], iteration_bounds = array<i64: 1>, scalar_prefetch = 0 : i64, scratch_operands = 0 : i64, tpu.core_type = #tpu.core_type<tc>, window_params = [{transform_indices = @transform_0, window_bounds = array<i64: 8, 16>}, {pipeline_mode = #tpu.pipeline_mode<synchronous>, transform_indices = @transform_1, window_bounds = array<i64: 16, 128>}, {pipeline_mode = #tpu.pipeline_mode<synchronous>, transform_indices = @transform_2, window_bounds = array<i64: 1, 128>}, {pipeline_mode = #tpu.pipeline_mode<synchronous>, transform_indices = @transform_3, window_bounds = array<i64: 128, 8>}, {pipeline_mode = #tpu.pipeline_mode<synchronous>, transform_indices = @transform_4, window_bounds = array<i64: 1, 8>}, {transform_indices = @transform_5, window_bounds = array<i64: 8, 8>}]} {
    %c0 = arith.constant 0 : index
    %c0_0 = arith.constant 0 : index
    %0 = vector.load %arg1[%c0, %c0_0] : memref<8x16xf32, #tpu.memory_space<vmem>>, vector<8x16xf32>
    %c0_1 = arith.constant 0 : index
    %c0_2 = arith.constant 0 : index
    %1 = vector.load %arg2[%c0_1, %c0_2] : memref<16x128xf32, #tpu.memory_space<vmem>>, vector<16x128xf32>
    %cst = arith.constant dense<0.000000e+00> : vector<8x128xf32>
    %2 = tpu.matmul %0, %1, %cst {dimension_numbers = #tpu.dot_dimension_numbers<[1], [0], [0], [1], [0, 0, 1, 1], [], []>} : vector<8x16xf32>, vector<16x128xf32>, vector<8x128xf32> -> vector<8x128xf32>
    %c0_3 = arith.constant 0 : index
    %c0_4 = arith.constant 0 : index
    %3 = vector.load %arg3[%c0_3, %c0_4] : memref<1x128xf32, #tpu.memory_space<vmem>>, vector<1x128xf32>
    %4 = vector.broadcast %3 : vector<1x128xf32> to vector<8x128xf32>
    %5 = arith.addf %2, %4 : vector<8x128xf32>
    %cst_5 = arith.constant 0.000000e+00 : f32
    %6 = vector.broadcast %cst_5 : f32 to vector<8x128xf32>
    %7 = arith.maximumf %5, %6 : vector<8x128xf32>
    %c0_6 = arith.constant 0 : index
    %c0_7 = arith.constant 0 : index
    %8 = vector.load %arg4[%c0_6, %c0_7] : memref<128x8xf32, #tpu.memory_space<vmem>>, vector<128x8xf32>
    %cst_8 = arith.constant dense<0.000000e+00> : vector<8x8xf32>
    %9 = tpu.matmul %7, %8, %cst_8 {dimension_numbers = #tpu.dot_dimension_numbers<[1], [0], [0], [1], [0, 0, 1, 1], [], []>} : vector<8x128xf32>, vector<128x8xf32>, vector<8x8xf32> -> vector<8x8xf32>
    %c0_9 = arith.constant 0 : index
    %c0_10 = arith.constant 0 : index
    %10 = vector.load %arg5[%c0_9, %c0_10] : memref<1x8xf32, #tpu.memory_space<vmem>>, vector<1x8xf32>
    %11 = vector.broadcast %10 : vector<1x8xf32> to vector<8x8xf32>
    %12 = arith.addf %9, %11 : vector<8x8xf32>
    %c0_11 = arith.constant 0 : index
    %c0_12 = arith.constant 0 : index
    %13 = vector.load %arg6[%c0_11, %c0_12] : memref<8x8xf32, #tpu.memory_space<vmem>>, vector<8x8xf32>
    tpu.vector_store %arg6[%c0_11, %c0_12], %12 {strides = array<i32>} : memref<8x8xf32, #tpu.memory_space<vmem>>, vector<8x8xf32>,
    return
  }
  func.func @transform_0(%arg0: i32) -> (i32, i32) {
    %c0_i32 = arith.constant 0 : i32
    %c0_i32_0 = arith.constant 0 : i32
    return %arg0, %c0_i32 : i32, i32
  }
  func.func @transform_1(%arg0: i32) -> (i32, i32) {
    %c0_i32 = arith.constant 0 : i32
    %c0_i32_0 = arith.constant 0 : i32
    %c0_i32_1 = arith.constant 0 : i32
    return %c0_i32, %c0_i32_0 : i32, i32
  }
  func.func @transform_2(%arg0: i32) -> (i32, i32) {
    %c0_i32 = arith.constant 0 : i32
    %c0_i32_0 = arith.constant 0 : i32
    %c0_i32_1 = arith.constant 0 : i32
    return %c0_i32, %c0_i32_0 : i32, i32
  }
  func.func @transform_3(%arg0: i32) -> (i32, i32) {
    %c0_i32 = arith.constant 0 : i32
    %c0_i32_0 = arith.constant 0 : i32
    %c0_i32_1 = arith.constant 0 : i32
    return %c0_i32, %c0_i32_0 : i32, i32
  }
  func.func @transform_4(%arg0: i32) -> (i32, i32) {
    %c0_i32 = arith.constant 0 : i32
    %c0_i32_0 = arith.constant 0 : i32
    %c0_i32_1 = arith.constant 0 : i32
    return %c0_i32, %c0_i32_0 : i32, i32
  }
  func.func @transform_5(%arg0: i32) -> (i32, i32) {
    %c0_i32 = arith.constant 0 : i32
    %c0_i32_0 = arith.constant 0 : i32
    return %arg0, %c0_i32 : i32, i32
  }
}

</mosaic_0001>

<llo_original>
// kernel: tpu_custom_call.1
$region0: #{tpu_custom_call.1}
  #allocation0 [shape = 'u32[]', space=smem, size = 0x4, offset = 0x4, fixed_abs, tag = 'smem constant byte address 0x4 - core index']
  #allocation1 [shape = 'u32[72,128]{1,0:T(1,128)}', space=vmem, size = 0x9000, scoped, tag = 'internal scratch']
  %s0 = inlined_call_operand.vmem [shape: f32[8,16], index: 0, kind: input, shape index: {}]
  %s1 = inlined_call_operand.vmem [shape: f32[16,128], index: 1, kind: input, shape index: {}]
  %s2 = inlined_call_operand.vmem [shape: f32[1,128], index: 2, kind: input, shape index: {}]
  %s3 = inlined_call_operand.vmem [shape: f32[128,8], index: 3, kind: input, shape index: {}]
  %s4 = inlined_call_operand.vmem [shape: f32[1,8], index: 4, kind: input, shape index: {}]
  %s5 = inlined_call_operand.hbm [shape: f32[8,8], index: 5, kind: output, shape index: {}]
  %s6 = sld [smem:[#allocation0]]
  $region30: #{tpu_custom_call.1} parent=0
    _
  %s8 = ssub.s32 1, %s6
  %s9 = scalar_select 0, %s8, %s6
  $region1: #{tpu_custom_call.1} parent=0
    #allocation2 [shape = 'u8[4096]{0}', space=vmem, size = 0x1000, scoped, tag = 'output window, operand 0, single buffered']
    #allocation3 [shape = 's32[1]{0}', space=sflag, size = 0x4, scoped, tag = 'scoped memory for tpu_custom_call.1']
    %10 = vsyncpa [#allocation3], 0
    // Predicated region
    $region2: #{tpu_custom_call.1} parent=1 // pred_check
      _
    $region3: #{tpu_custom_call.1} parent=1 // pred_check_branch
      %12 = sbr.rel (0) target = $region5
    $region4: #{tpu_custom_call.1} parent=1 // pred_region
      _
    $region5: #{tpu_custom_call.1} parent=1 // pred_fallthru
      _
    // Predicated region
    $region6: #{tpu_custom_call.1} parent=1 // pred_check
      _
    $region7: #{tpu_custom_call.1} parent=1 // pred_check_branch
      %14 = sbr.rel (0) target = $region9
    $region8: #{tpu_custom_call.1} parent=1 // pred_region
      _
    $region9: #{tpu_custom_call.1} parent=1 // pred_fallthru
      _
    // Predicated region
    $region10: #{tpu_custom_call.1} parent=1 // pred_check
      _
    $region11: #{tpu_custom_call.1} parent=1 // pred_check_branch
      %16 = sbr.rel (0) target = $region13
    $region12: #{tpu_custom_call.1} parent=1 // pred_region
      _
    $region13: #{tpu_custom_call.1} parent=1 // pred_fallthru
      _
    // Predicated region
    $region14: #{tpu_custom_call.1} parent=1 // pred_check
      _
    $region15: #{tpu_custom_call.1} parent=1 // pred_check_branch
      %18 = sbr.rel (0) target = $region17
    $region16: #{tpu_custom_call.1} parent=1 // pred_region
      _
    $region17: #{tpu_custom_call.1} parent=1 // pred_fallthru
      _
    // Predicated region
    $region18: #{tpu_custom_call.1} parent=1 // pred_check
      _
    $region19: #{tpu_custom_call.1} parent=1 // pred_check_branch
      %20 = sbr.rel (0) target = $region21
    $region20: #{tpu_custom_call.1} parent=1 // pred_region
      _
    $region21: #{tpu_custom_call.1} parent=1 // pred_fallthru
      _
    %v21 = vld [vmem:[%s0] sm:$0xff]
    %v22 = vld [vmem:[%s1] sm:$0xff]
    %v23 = vld [vmem:[%s1 + $0x8] sm:$0xff]
    %v24 = vld [vmem:[%s2] sm:$0x1]
    %v26 = vperm.slane %v24, 0
    %vm28 = vcmask 130048
    %v30 = vsel %vm28, %v21, 0
    %32 = vmatpush.msra.mxu0 0.0
    %33 = vmatpush.msra.mxu0 0.0
    %34 = vmatpush.msra.mxu0 0.0
    %35 = vmatpush.msra.mxu0 0.0
    %36 = vmatpush.msra.mxu0 0.0
    %37 = vmatpush.msra.mxu0 0.0
    %38 = vmatpush.msra.mxu0 0.0
    %39 = vmatpush.msra.mxu0 0.0
    %40 = vmatpush.msra.mxu0 0.0
    %41 = vmatpush.msra.mxu0 0.0
    %42 = vmatpush.msra.mxu0 0.0
    %43 = vmatpush.msra.mxu0 0.0
    %44 = vmatpush.msra.mxu0 0.0
    %45 = vmatpush.msra.mxu0 0.0
    %46 = vmatpush.msra.mxu0 %v23
    %47 = vmatpush.msra.mxu0 %v22
    %48 = vmatmul.f32.gmra.mxu0 %v30
    %v49 = vpop.f32.mrf.mxu0
    %v50 = vadd.f32 %v26, %v49
    %51 = vdwg.mxu0
    %v52 = vmax.f32 %v50, 0.0
    %v53 = vld [vmem:[%s3] sm:$0xff]
    %v54 = vld [vmem:[%s3 + $0x8] sm:$0xff]
    %v55 = vld [vmem:[%s3 + $0x10] sm:$0xff]
    %v56 = vld [vmem:[%s3 + $0x18] sm:$0xff]
    %v57 = vld [vmem:[%s3 + $0x20] sm:$0xff]
    %v58 = vld [vmem:[%s3 + $0x28] sm:$0xff]
    %v59 = vld [vmem:[%s3 + $0x30] sm:$0xff]
    %v60 = vld [vmem:[%s3 + $0x38] sm:$0xff]
    %v61 = vld [vmem:[%s3 + $0x40] sm:$0xff]
    %v62 = vld [vmem:[%s3 + $0x48] sm:$0xff]
    %v63 = vld [vmem:[%s3 + $0x50] sm:$0xff]
    %v64 = vld [vmem:[%s3 + $0x58] sm:$0xff]
    %v65 = vld [vmem:[%s3 + $0x60] sm:$0xff]
    %v66 = vld [vmem:[%s3 + $0x68] sm:$0xff]
    %v67 = vld [vmem:[%s3 + $0x70] sm:$0xff]
    %v68 = vld [vmem:[%s3 + $0x78] sm:$0xff]
    %v69 = vld [vmem:[%s4] sm:$0x1]
    %v71 = vperm.slane %v69, 0
    %73 = vmatpush.msra.mxu0 %v68
    %74 = vmatpush.msra.mxu0 %v67
    %75 = vmatpush.msra.mxu0 %v66
    %76 = vmatpush.msra.mxu0 %v65
    %77 = vmatpush.msra.mxu0 %v64
    %78 = vmatpush.msra.mxu0 %v63
    %79 = vmatpush.msra.mxu0 %v62
    %80 = vmatpush.msra.mxu0 %v61
    %81 = vmatpush.msra.mxu0 %v60
    %82 = vmatpush.msra.mxu0 %v59
    %83 = vmatpush.msra.mxu0 %v58
    %84 = vmatpush.msra.mxu0 %v57
    %85 = vmatpush.msra.mxu0 %v56
    %86 = vmatpush.msra.mxu0 %v55
    %87 = vmatpush.msra.mxu0 %v54
    %88 = vmatpush.msra.mxu0 %v53
    %89 = vmatmul.f32.gmra.mxu0 %v52
    %v90 = vpop.f32.mrf.mxu0
    %v91 = vadd.f32 %v71, %v90
    %92 = vdwg.mxu0
    %vm93 = vcmask 64512
    %94 = vst.msk [vmem:[#allocation2] sm:$0xff] %vm93, %v91
    // Predicated region
    $region22: #{tpu_custom_call.1} parent=1 // pred_check
      _
    $region23: #{tpu_custom_call.1} parent=1 // pred_check_branch
      %96 = sbr.rel (0) target = $region25
    $region24: #{tpu_custom_call.1} parent=1 // pred_region
      %98 = vsyncadd [#allocation3], 0
      %s100 = sshll.u32 [#allocation2], 4
      %s101 = int_to_ptr.vmem [resolvable:$true] %s100
      %s102 = sshll.u32 %s5, 4
      %s103 = int_to_ptr.hbm [resolvable:$true] %s102
      %105 = dma.vmem_to_hbm [thread:$0]  %s101, 128, %s103, [#allocation3]
    $region25: #{tpu_custom_call.1} parent=1 // pred_fallthru
      _
    // Predicated region
    $region26: #{tpu_custom_call.1} parent=1 // pred_check
      _
    $region27: #{tpu_custom_call.1} parent=1 // pred_check_branch
      %107 = sbr.rel (0) target = $region29
    $region28: #{tpu_custom_call.1} parent=1 // pred_region
      %109 = dma.done [#allocation3], 128
    $region29: #{tpu_custom_call.1} parent=1 // pred_fallthru
      _
    %110 = vsyncpa [#allocation3], 1

</llo_original>
